<compile_context>
chip_gen: v7x
topology: tpu7x:2x2x1
jax: 0.10.0
libtpu: 0.0.40
codegen_flags: <defaults>
</compile_context>

<pallas_src>
import jax
import jax.numpy as jnp
from jax.experimental import pallas as pl
from jax.experimental.pallas import tpu as pltpu


def _dot_sum_kernel(feat_ref, target_ref, partial_ref, acc_ref):
    """Accumulate elementwise feat*target into a VMEM vector accumulator.

    Grid = (splits [parallel], row-tiles [arbitrary reduction]).  The partial
    sum for this split is written once, at the last reduction step.
    """
    k = pl.program_id(1)

    @pl.when(k == 0)
    def _init():
        acc_ref[...] = jnp.zeros_like(acc_ref)

    f = feat_ref[...].astype(jnp.float32)
    t = target_ref[...].astype(jnp.float32)
    acc_ref[...] += f * t  # pure VPU work; hidden under the HBM DMA stream

    @pl.when(k == pl.num_programs(1) - 1)
    def _finalize():
        total = jnp.sum(acc_ref[...])  # single full reduce per split
        partial_ref[...] = jnp.full(partial_ref.shape, total, dtype=jnp.float32)


def _round_up(x, m):
    return ((x + m - 1) // m) * m


def dot_loss(feat, target, *, loss_weight=1.0,
             lane_width=512, vmem_working_set_bytes=24 * 1024 * 1024):
    """Pallas implementation of DotLoss.forward (reduction='mean')."""
    assert feat.shape == target.shape and feat.ndim == 2
    n, d = feat.shape
    total = n * d

    # ---- lane-dense flat view: (rows, lane_width), zero padded. ----
    rows = -(-total // lane_width)

    # Two TensorCore splits on megacore parts (v7x); on single-core chips the
    # parallel axis is just a cheap serial outer loop.  Skip for tiny inputs.
    num_splits = 2 if rows >= 16 else 1

    # ---- row-tile size: biggest tile whose 2-input x 2-buffer pipeline plus
    # the f32 accumulator fits the working-set budget (kept well under v7x's
    # 64 MiB physical VMEM). ----
    in_itemsize = feat.dtype.itemsize
    per_row_bytes = lane_width * (2 * 2 * in_itemsize + 4)
    max_block_rows = max(8, (vmem_working_set_bytes // per_row_bytes) // 8 * 8)

    rows_per_split = -(-rows // num_splits)
    block_rows = min(max_block_rows, _round_up(rows_per_split, 8))
    steps = -(-rows_per_split // block_rows)
    rows_padded = num_splits * steps * block_rows

    pad = rows_padded * lane_width - total
    feat_flat = feat.reshape(-1)
    target_flat = target.reshape(-1)
    if pad:
        feat_flat = jnp.pad(feat_flat, (0, pad))      # zero pad: contributes 0
        target_flat = jnp.pad(target_flat, (0, pad))
    feat2 = feat_flat.reshape(rows_padded, lane_width)
    target2 = target_flat.reshape(rows_padded, lane_width)

    in_spec = pl.BlockSpec((block_rows, lane_width),
                           lambda s, k: (s * steps + k, 0))

    partials = pl.pallas_call(
        _dot_sum_kernel,
        out_shape=jax.ShapeDtypeStruct((num_splits, 8, 128), jnp.float32),
        grid_spec=pltpu.PrefetchScalarGridSpec(
            num_scalar_prefetch=0,
            grid=(num_splits, steps),
            in_specs=[in_spec, in_spec],
            out_specs=pl.BlockSpec((1, 8, 128), lambda s, k: (s, 0, 0)),
            scratch_shapes=[pltpu.VMEM((block_rows, lane_width), jnp.float32)],
        ),
        compiler_params=pltpu.CompilerParams(
            dimension_semantics=("parallel", "arbitrary"),
            vmem_limit_bytes=48 * 1024 * 1024,
        ),
    )(feat2, target2)

    dot_sum = jnp.sum(partials[:, 0, 0])
    return (jnp.float32(1.0) - dot_sum / jnp.float32(n)) * jnp.float32(loss_weight)


def _reference(feat, target, loss_weight):
    return (1.0 - jnp.sum(feat * target, axis=1)).mean() * loss_weight


if __name__ == "__main__":
    key = jax.random.PRNGKey(0)
    loss_weight = 1.0

    # --- primary small case, matching the module's (num_samples, feat_dim) ---
    N, D = 8, 32
    k1, k2, key = jax.random.split(key, 3)
    feat = jax.random.normal(k1, (N, D), dtype=jnp.float32)
    target = jax.random.normal(k2, (N, D), dtype=jnp.float32)
    # The module asserts unit L2 norm along dim=1 — normalize to satisfy it.
    feat = feat / jnp.linalg.norm(feat, axis=1, keepdims=True)
    target = target / jnp.linalg.norm(target, axis=1, keepdims=True)
    assert jnp.allclose(jnp.linalg.norm(feat, axis=1), jnp.ones((N,)), atol=1e-5)
    assert jnp.allclose(jnp.linalg.norm(target, axis=1), jnp.ones((N,)), atol=1e-5)

    loss = jax.block_until_ready(dot_loss(feat, target, loss_weight=loss_weight))
    ref = _reference(feat, target, loss_weight)
    assert jnp.allclose(loss, ref, atol=1e-5, rtol=1e-5), (loss, ref)

    # --- secondary case exercising the TC-split + multi-step reduction path ---
    N2, D2 = 512, 384
    k3, k4, key = jax.random.split(key, 3)
    feat2 = jax.random.normal(k3, (N2, D2), dtype=jnp.float32)
    target2 = jax.random.normal(k4, (N2, D2), dtype=jnp.float32)
    feat2 = feat2 / jnp.linalg.norm(feat2, axis=1, keepdims=True)
    target2 = target2 / jnp.linalg.norm(target2, axis=1, keepdims=True)

    # Small working-set budget forces block_rows=96 -> grid (2 splits, 2 steps).
    loss2 = jax.block_until_ready(
        dot_loss(feat2, target2, loss_weight=loss_weight,
                 vmem_working_set_bytes=1 << 20))
    ref2 = _reference(feat2, target2, loss_weight)
    assert jnp.allclose(loss2, ref2, atol=1e-5, rtol=1e-5), (loss2, ref2)

    print("KERNEL_OK")
</pallas_src>

<mosaic_0001>
module attributes {stable_mosaic.version = 11 : i64} {
  func.func @_dot_sum_kernel(%arg0: i32, %arg1: i32, %arg2: memref<8x512xf32, #tpu.memory_space<vmem>>, %arg3: memref<8x512xf32, #tpu.memory_space<vmem>>, %arg4: memref<1x8x128xf32, #tpu.memory_space<vmem>>, %arg5: memref<8x512xf32, #tpu.memory_space<vmem>>) attributes {dimension_semantics = [#tpu.dimension_semantics<parallel>, #tpu.dimension_semantics<arbitrary>], iteration_bounds = array<i64: 1, 1>, scalar_prefetch = 0 : i64, scratch_operands = 1 : i64, tpu.core_type = #tpu.core_type<tc>, window_params = [{transform_indices = @transform_0, window_bounds = array<i64: 8, 512>}, {transform_indices = @transform_1, window_bounds = array<i64: 8, 512>}, {transform_indices = @transform_2, window_bounds = array<i64: 1, 8, 128>}]} {
    %c0_i32 = arith.constant 0 : i32
    %0 = arith.cmpi eq, %arg1, %c0_i32 : i32
    %1 = arith.extui %0 : i1 to i32
    %c0_i32_0 = arith.constant 0 : i32
    %2 = arith.cmpi ne, %1, %c0_i32_0 : i32
    scf.if %2 {
      %cst = arith.constant 0.000000e+00 : f32
      %12 = vector.broadcast %cst : f32 to vector<8x512xf32>
      %c0_10 = arith.constant 0 : index
      %c0_11 = arith.constant 0 : index
      %13 = vector.load %arg5[%c0_10, %c0_11] : memref<8x512xf32, #tpu.memory_space<vmem>>, vector<8x512xf32>
      tpu.vector_store %arg5[%c0_10, %c0_11], %12 {strides = array<i32>} : memref<8x512xf32, #tpu.memory_space<vmem>>, vector<8x512xf32>,
    } else {
    }
    %c0 = arith.constant 0 : index
    %c0_1 = arith.constant 0 : index
    %3 = vector.load %arg2[%c0, %c0_1] : memref<8x512xf32, #tpu.memory_space<vmem>>, vector<8x512xf32>
    %c0_2 = arith.constant 0 : index
    %c0_3 = arith.constant 0 : index
    %4 = vector.load %arg3[%c0_2, %c0_3] : memref<8x512xf32, #tpu.memory_space<vmem>>, vector<8x512xf32>
    %c0_4 = arith.constant 0 : index
    %c0_5 = arith.constant 0 : index
    %5 = vector.load %arg5[%c0_4, %c0_5] : memref<8x512xf32, #tpu.memory_space<vmem>>, vector<8x512xf32>
    %6 = arith.mulf %3, %4 : vector<8x512xf32>
    %7 = arith.addf %5, %6 : vector<8x512xf32>
    %c0_6 = arith.constant 0 : index
    %c0_7 = arith.constant 0 : index
    %8 = vector.load %arg5[%c0_6, %c0_7] : memref<8x512xf32, #tpu.memory_space<vmem>>, vector<8x512xf32>
    tpu.vector_store %arg5[%c0_6, %c0_7], %7 {strides = array<i32>} : memref<8x512xf32, #tpu.memory_space<vmem>>, vector<8x512xf32>,
    %c0_i32_8 = arith.constant 0 : i32
    %9 = arith.cmpi eq, %arg1, %c0_i32_8 : i32
    %10 = arith.extui %9 : i1 to i32
    %c0_i32_9 = arith.constant 0 : i32
    %11 = arith.cmpi ne, %10, %c0_i32_9 : i32
    scf.if %11 {
      %c0_10 = arith.constant 0 : index
      %c0_11 = arith.constant 0 : index
      %12 = vector.load %arg5[%c0_10, %c0_11] : memref<8x512xf32, #tpu.memory_space<vmem>>, vector<8x512xf32>
      %13 = vector.shape_cast %12 : vector<8x512xf32> to vector<1x8x512xf32>
      %cst = arith.constant dense<0.000000e+00> : vector<1xf32>
      %14 = vector.multi_reduction <add>, %13, %cst [1, 2] : vector<1x8x512xf32> to vector<1xf32>
      %15 = vector.shape_cast %14 : vector<1xf32> to vector<1x1x1xf32>
      %16 = vector.extract %15[0, 0, 0] : f32 from vector<1x1x1xf32>
      %17 = vector.broadcast %16 : f32 to vector<1x8x128xf32>
      %c0_12 = arith.constant 0 : index
      %c0_13 = arith.constant 0 : index
      %c0_14 = arith.constant 0 : index
      %18 = vector.load %arg4[%c0_12, %c0_13, %c0_14] : memref<1x8x128xf32, #tpu.memory_space<vmem>>, vector<1x8x128xf32>
      tpu.vector_store %arg4[%c0_12, %c0_13, %c0_14], %17 {strides = array<i32>} : memref<1x8x128xf32, #tpu.memory_space<vmem>>, vector<1x8x128xf32>,
    } else {
    }
    return
  }
  func.func @transform_0(%arg0: i32, %arg1: i32) -> (i32, i32) {
    %c1_i32 = arith.constant 1 : i32
    %0 = arith.muli %arg0, %c1_i32 : i32
    %1 = arith.addi %0, %arg1 : i32
    %c0_i32 = arith.constant 0 : i32
    %c0_i32_0 = arith.constant 0 : i32
    return %1, %c0_i32 : i32, i32
  }
  func.func @transform_1(%arg0: i32, %arg1: i32) -> (i32, i32) {
    %c1_i32 = arith.constant 1 : i32
    %0 = arith.muli %arg0, %c1_i32 : i32
    %1 = arith.addi %0, %arg1 : i32
    %c0_i32 = arith.constant 0 : i32
    %c0_i32_0 = arith.constant 0 : i32
    return %1, %c0_i32 : i32, i32
  }
  func.func @transform_2(%arg0: i32, %arg1: i32) -> (i32, i32, i32) {
    %c0_i32 = arith.constant 0 : i32
    %c0_i32_0 = arith.constant 0 : i32
    %c0_i32_1 = arith.constant 0 : i32
    return %arg0, %c0_i32, %c0_i32_0 : i32, i32, i32
  }
}

</mosaic_0001>

<llo_original>
// kernel: tpu_custom_call.1
$region0: #{tpu_custom_call.1}
  #allocation0 [shape = 'u32[]', space=smem, size = 0x4, offset = 0x4, fixed_abs, tag = 'smem constant byte address 0x4 - core index']
  #allocation1 [shape = 'u32[144,128]{1,0:T(1,128)}', space=vmem, size = 0x12000, scoped, tag = 'internal scratch']
  #allocation2 [shape = 'f32[8,512]{1,0:T(8,128)}', space=vmem, size = 0x4000, scoped, tag = 'scratch operand']
  %s0 = inlined_call_operand.hbm [shape: f32[8,512], index: 0, kind: input, shape index: {}]
  %s1 = inlined_call_operand.hbm [shape: f32[8,512], index: 1, kind: input, shape index: {}]
  %s2 = inlined_call_operand.hbm [shape: f32[1,8,128], index: 2, kind: output, shape index: {}]
  %s3 = sld [smem:[#allocation0]]
  $region34: #{tpu_custom_call.1} parent=0
    _
  %s5 = ssub.s32 1, %s3
  %s6 = scalar_select 0, %s5, %s3
  $region1: #{tpu_custom_call.1} parent=0
    #allocation3 [shape = 'u8[16384]{0}', space=vmem, size = 0x4000, scoped, tag = 'input window, operand 0, single buffered']
    #allocation4 [shape = 's32[1]{0}', space=sflag, size = 0x4, scoped, tag = 'scoped memory for tpu_custom_call.1']
    #allocation5 [shape = 's32[1]{0}', space=sflag, size = 0x4, scoped, tag = 'scoped memory for tpu_custom_call.1']
    #allocation6 [shape = 'u8[16384]{0}', space=vmem, size = 0x4000, scoped, tag = 'input window, operand 1, single buffered']
    #allocation7 [shape = 's32[1]{0}', space=sflag, size = 0x4, scoped, tag = 'scoped memory for tpu_custom_call.1']
    #allocation8 [shape = 'u8[4096]{0}', space=vmem, size = 0x1000, scoped, tag = 'output window, operand 0, single buffered']
    %7 = vsyncpa [#allocation4], 0
    %8 = vsyncpa [#allocation7], 0
    %9 = vsyncpa [#allocation5], 0
    // Predicated region
    $region2: #{tpu_custom_call.1} parent=1 // pred_check
      _
    $region3: #{tpu_custom_call.1} parent=1 // pred_check_branch
      %11 = sbr.rel (0) target = $region5
    $region4: #{tpu_custom_call.1} parent=1 // pred_region
      %s12 = sadd.s32 0, 0
      %s14 = ssub.s32 512, 512
      %15 = vsyncadd [#allocation4], %s14
      %s16 = smul.addr %s12, 4
      %s17 = smul.addr %s16, 128
      %s18 = scalar_lea.hbm %s0, %s17
      %s20 = sshll.u32 [#allocation3], 4
      %s21 = int_to_ptr.vmem [resolvable:$true] %s20
      %23 = dma.hbm_to_vmem [thread:$0]  %s18, 512, %s21, [#allocation4]
    $region5: #{tpu_custom_call.1} parent=1 // pred_fallthru
      _
    // Predicated region
    $region6: #{tpu_custom_call.1} parent=1 // pred_check
      _
    $region7: #{tpu_custom_call.1} parent=1 // pred_check_branch
      %25 = sbr.rel (0) target = $region9
    $region8: #{tpu_custom_call.1} parent=1 // pred_region
      %s26 = sadd.s32 0, 0
      %s28 = ssub.s32 512, 512
      %29 = vsyncadd [#allocation7], %s28
      %s30 = smul.addr %s26, 4
      %s31 = smul.addr %s30, 128
      %s32 = scalar_lea.hbm %s1, %s31
      %s34 = sshll.u32 [#allocation6], 4
      %s35 = int_to_ptr.vmem [resolvable:$true] %s34
      %37 = dma.hbm_to_vmem [thread:$0]  %s32, 512, %s35, [#allocation7]
    $region9: #{tpu_custom_call.1} parent=1 // pred_fallthru
      _
    // Predicated region
    $region10: #{tpu_custom_call.1} parent=1 // pred_check
      _
    $region11: #{tpu_custom_call.1} parent=1 // pred_check_branch
      %39 = sbr.rel (0) target = $region13
    $region12: #{tpu_custom_call.1} parent=1 // pred_region
      %40 = dma.done [#allocation4], 512
    $region13: #{tpu_custom_call.1} parent=1 // pred_fallthru
      _
    // Predicated region
    $region14: #{tpu_custom_call.1} parent=1 // pred_check
      _
    $region15: #{tpu_custom_call.1} parent=1 // pred_check_branch
      %42 = sbr.rel (0) target = $region17
    $region16: #{tpu_custom_call.1} parent=1 // pred_region
      %43 = dma.done [#allocation7], 512
    $region17: #{tpu_custom_call.1} parent=1 // pred_fallthru
      _
    %s44 = sadd.s32 0, 0
    %s45 = sadd.s32 0, 0
    %p46 = scmp.eq.s32.totalorder 0, 0
    // Predicated region
    $region18: #{tpu_custom_call.1} parent=1 // pred_check
      %p47 = pneg %p46
    $region19: #{tpu_custom_call.1} parent=1 // pred_check_branch
      %49 = sbr.rel (%p47) target = $region21
    $region20: #{tpu_custom_call.1} parent=1 // pred_region
      %50 = vst [vmem:[#allocation2] sm:$0xff] 0.0
      %51 = vst [vmem:[#allocation2 + $0x8] sm:$0xff] 0.0
      %52 = vst [vmem:[#allocation2 + $0x10] sm:$0xff] 0.0
      %53 = vst [vmem:[#allocation2 + $0x18] sm:$0xff] 0.0
    $region21: #{tpu_custom_call.1} parent=1 // pred_fallthru
      _
    %v54 = vld [vmem:[#allocation3] sm:$0xff]
    %v55 = vld [vmem:[#allocation3 + $0x8] sm:$0xff]
    %v56 = vld [vmem:[#allocation3 + $0x10] sm:$0xff]
    %v57 = vld [vmem:[#allocation3 + $0x18] sm:$0xff]
    %v58 = vld [vmem:[#allocation6] sm:$0xff]
    %v59 = vld [vmem:[#allocation6 + $0x8] sm:$0xff]
    %v60 = vld [vmem:[#allocation6 + $0x10] sm:$0xff]
    %v61 = vld [vmem:[#allocation6 + $0x18] sm:$0xff]
    %v62 = vld [vmem:[#allocation2] sm:$0xff]
    %v63 = vld [vmem:[#allocation2 + $0x8] sm:$0xff]
    %v64 = vld [vmem:[#allocation2 + $0x10] sm:$0xff]
    %v65 = vld [vmem:[#allocation2 + $0x18] sm:$0xff]
    %v66 = vmul.f32 %v54, %v58
    %v67 = vmul.f32 %v55, %v59
    %v68 = vmul.f32 %v56, %v60
    %v69 = vmul.f32 %v57, %v61
    %v70 = vadd.f32 %v62, %v66
    %v71 = vadd.f32 %v63, %v67
    %v72 = vadd.f32 %v64, %v68
    %v73 = vadd.f32 %v65, %v69
    %74 = vst [vmem:[#allocation2] sm:$0xff] %v70
    %75 = vst [vmem:[#allocation2 + $0x8] sm:$0xff] %v71
    %76 = vst [vmem:[#allocation2 + $0x10] sm:$0xff] %v72
    %77 = vst [vmem:[#allocation2 + $0x18] sm:$0xff] %v73
    // Predicated region
    $region22: #{tpu_custom_call.1} parent=1 // pred_check
      %p78 = pneg %p46
    $region23: #{tpu_custom_call.1} parent=1 // pred_check_branch
      %80 = sbr.rel (%p78) target = $region25
    $region24: #{tpu_custom_call.1} parent=1 // pred_region
      %v81 = vld [vmem:[#allocation2] sm:$0xff]
      %v82 = vld [vmem:[#allocation2 + $0x8] sm:$0xff]
      %v83 = vld [vmem:[#allocation2 + $0x10] sm:$0xff]
      %v84 = vld [vmem:[#allocation2 + $0x18] sm:$0xff]
      %v85 = vadd.f32 %v81, %v82
      %v86 = vadd.f32 %v85, %v83
      %v87 = vadd.f32 %v86, %v84
      %88 = vadd.xlane.f32.xlu0 %v87
      %v89 = vpop.xlane.xlu0 %88
      %v90 = vrot.slane %v89, 4
      %v91 = vadd.f32 %v89, %v90
      %v92 = vrot.slane %v91, 2
      %v93 = vadd.f32 %v91, %v92
      %v94 = vrot.slane %v93, 1
      %v95 = vadd.f32 %v93, %v94
      %s96 = vtos %v95
      %v97 = vstv %s96
      %98 = vst [vmem:[#allocation8] sm:$0xff] %v97
    $region25: #{tpu_custom_call.1} parent=1 // pred_fallthru
      _
    // Predicated region
    $region26: #{tpu_custom_call.1} parent=1 // pred_check
      _
    $region27: #{tpu_custom_call.1} parent=1 // pred_check_branch
      %100 = sbr.rel (0) target = $region29
    $region28: #{tpu_custom_call.1} parent=1 // pred_region
      %s102 = ssub.s32 128, 128
      %103 = vsyncadd [#allocation5], %s102
      %s105 = sshll.u32 [#allocation8], 4
      %s106 = int_to_ptr.vmem [resolvable:$true] %s105
      %108 = dma.vmem_to_hbm [thread:$0]  %s106, 128, %s2, [#allocation5]
    $region29: #{tpu_custom_call.1} parent=1 // pred_fallthru
      _
    // Predicated region
    $region30: #{tpu_custom_call.1} parent=1 // pred_check
      _
    $region31: #{tpu_custom_call.1} parent=1 // pred_check_branch
      %110 = sbr.rel (0) target = $region33
    $region32: #{tpu_custom_call.1} parent=1 // pred_region
      %111 = dma.done [#allocation5], 128
    $region33: #{tpu_custom_call.1} parent=1 // pred_fallthru
      _
    %112 = vsyncpa [#allocation4], 1
    %113 = vsyncpa [#allocation7], 1
    %114 = vsyncpa [#allocation5], 1

</llo_original>
